<compile_context>
chip_gen: v5e
topology: v5e:2x2
jax: 0.10.0
libtpu: 0.0.40
codegen_flags: <defaults>
</compile_context>

<pallas_src>
import jax
import jax.numpy as jnp
from jax.experimental import pallas as pl
from jax.experimental.pallas import tpu as pltpu


def _round_up(x, m):
    return ((x + m - 1) // m) * m


def _mlp_kernel(state_ref, action_ref, w1s_ref, w1a_ref, b1_ref,
                w2_ref, b2_ref, w3_ref, b3_ref, o_ref):
    s = state_ref[...]                            # (TB, s_dim) f32
    a = action_ref[...]                           # (TB, a_dim) f32
    w1s = w1s_ref[...]                            # (s_dim, 256) f32
    w1a = w1a_ref[...]                            # (a_dim, 256) f32

    # ---- Layer 1 on the VPU: K = s_dim + a_dim is tiny (5); unrolled
    # broadcast FMAs, bias folded into the first term.
    acc = b1_ref[...] + s[:, 0:1] * w1s[0:1, :]   # (TB, 256)
    for i in range(1, s.shape[1]):
        acc = acc + s[:, i:i + 1] * w1s[i:i + 1, :]
    for j in range(a.shape[1]):
        acc = acc + a[:, j:j + 1] * w1a[j:j + 1, :]
    h1 = jnp.maximum(acc, 0.0)

    # ---- Layer 2: the only MXU-friendly matmul (256x256). Operand dtype
    # follows the stored weight dtype (f32 or bf16); accumulate in f32.
    w2 = w2_ref[...]
    h2 = jnp.dot(h1.astype(w2.dtype), w2,
                 preferred_element_type=jnp.float32)
    h2 = jnp.maximum(h2 + b2_ref[...], 0.0)

    # ---- Layer 3 (N = 1) as VPU mul + cross-lane (XLU) reduce instead of a
    # 1-column MXU matmul that would pad the output to a full 128-lane tile.
    out = jnp.sum(h2 * w3_ref[...], axis=-1, keepdims=True) + b3_ref[...]
    o_ref[...] = out.astype(o_ref.dtype)


def prepare_params(torch_params, s_dim, *, w2_dtype=jnp.float32):
    """One-time layout prep: PyTorch Linear stores [out, in]; the kernel wants
    [in, out], W1 split into state/action halves, 2-D row biases, and
    (optionally) the 256x256 weight cast to bf16 for v6e/v7x MXU throughput."""
    (w1, b1), (w2, b2), (w3, b3) = torch_params
    w1_t = jnp.asarray(w1, jnp.float32).T                    # [5, 256]
    return dict(
        w1s=w1_t[:s_dim],                                    # [s_dim, 256]
        w1a=w1_t[s_dim:],                                    # [a_dim, 256]
        b1=jnp.asarray(b1, jnp.float32).reshape(1, -1),      # [1, 256]
        w2=jnp.asarray(w2, jnp.float32).T.astype(w2_dtype),  # [256, 256]
        b2=jnp.asarray(b2, jnp.float32).reshape(1, -1),      # [1, 256]
        w3=jnp.asarray(w3, jnp.float32).reshape(1, -1),      # [1, 256]
        b3=jnp.asarray(b3, jnp.float32).reshape(1, 1),       # [1, 1]
    )


def model_value_forward(state, action, kparams, *, tb=1024):
    """state: [B, s_dim] f32, action: [B, a_dim] f32 (s_dim + a_dim == 5)."""
    B, s_dim = state.shape
    a_dim = action.shape[1]
    H = kparams["w2"].shape[0]                   # hidden width (256)
    TB = min(tb, _round_up(B, 8))                # sublane-aligned batch tile
    grid = (pl.cdiv(B, TB),)

    def resident(arr):
        # Full-array block + constant index_map: DMA'd once, stays
        # VMEM-resident across all batch-grid iterations.
        return pl.BlockSpec(arr.shape, lambda i, _nd=arr.ndim: (0,) * _nd)

    k_in = s_dim + a_dim
    cost = pl.CostEstimate(
        flops=2 * B * (k_in * H + H * H + H),
        transcendentals=0,
        bytes_accessed=(B * (k_in + 1) * 4
                        + sum(v.size * v.dtype.itemsize for v in kparams.values())),
    )

    p = kparams
    return pl.pallas_call(
        _mlp_kernel,
        out_shape=jax.ShapeDtypeStruct((B, 1), jnp.float32),
        grid=grid,
        in_specs=[
            pl.BlockSpec((TB, s_dim), lambda i: (i, 0)),
            pl.BlockSpec((TB, a_dim), lambda i: (i, 0)),
            resident(p["w1s"]), resident(p["w1a"]), resident(p["b1"]),
            resident(p["w2"]), resident(p["b2"]),
            resident(p["w3"]), resident(p["b3"]),
        ],
        out_specs=pl.BlockSpec((TB, 1), lambda i: (i, 0)),
        compiler_params=pltpu.CompilerParams(
            dimension_semantics=("parallel",)),   # dual-TC sharding on v7x
        cost_estimate=cost,
    )(state, action, p["w1s"], p["w1a"], p["b1"], p["w2"], p["b2"],
      p["w3"], p["b3"])


def init_params(key):
    """Deterministic init mimicking PyTorch Linear default (U(+-1/sqrt(fan_in)))."""
    def linear(k, fan_in, fan_out):
        kw, kb = jax.random.split(k)
        bound = 1.0 / jnp.sqrt(fan_in)
        w = jax.random.uniform(kw, (fan_out, fan_in), jnp.float32, -bound, bound)
        b = jax.random.uniform(kb, (fan_out,), jnp.float32, -bound, bound)
        return w, b

    k1, k2, k3 = jax.random.split(key, 3)
    return (linear(k1, 5, 256), linear(k2, 256, 256), linear(k3, 256, 1))


def _reference(state, action, torch_params):
    (w1, b1), (w2, b2), (w3, b3) = torch_params
    x = jnp.concatenate([state, action], axis=1)
    h1 = jnp.maximum(x @ w1.T + b1, 0.0)
    h2 = jnp.maximum(h1 @ w2.T + b2, 0.0)
    return h2 @ w3.T + b3


if __name__ == "__main__":
    key = jax.random.PRNGKey(0)
    kp, ks, ka = jax.random.split(key, 3)

    B, S_DIM, A_DIM = 8, 3, 2      # state + action = 5, matching Linear(5, 256)
    state = jax.random.normal(ks, (B, S_DIM), jnp.float32)
    action = jax.random.normal(ka, (B, A_DIM), jnp.float32)

    raw_params = init_params(kp)
    ref = _reference(state, action, raw_params)

    # f32 path: matches PyTorch module numerics.
    kparams = prepare_params(raw_params, S_DIM)
    out = jax.block_until_ready(model_value_forward(state, action, kparams))
    assert out.shape == (B, 1), out.shape
    assert jnp.allclose(out, ref, atol=1e-4, rtol=1e-4), \
        float(jnp.max(jnp.abs(out - ref)))

    # bf16 middle-layer path (v6e/v7x MXU-friendly), f32 accumulation.
    kparams_bf16 = prepare_params(raw_params, S_DIM, w2_dtype=jnp.bfloat16)
    out_bf16 = jax.block_until_ready(
        model_value_forward(state, action, kparams_bf16))
    assert jnp.allclose(out_bf16, ref, atol=3e-2, rtol=3e-2), \
        float(jnp.max(jnp.abs(out_bf16 - ref)))

    print("KERNEL_OK")
</pallas_src>

<mosaic_0001>
module attributes {stable_mosaic.version = 11 : i64} {
  func.func @_mlp_kernel(%arg0: i32, %arg1: memref<8x3xf32, #tpu.memory_space<vmem>>, %arg2: memref<8x2xf32, #tpu.memory_space<vmem>>, %arg3: memref<3x256xf32, #tpu.memory_space<vmem>>, %arg4: memref<2x256xf32, #tpu.memory_space<vmem>>, %arg5: memref<1x256xf32, #tpu.memory_space<vmem>>, %arg6: memref<256x256xf32, #tpu.memory_space<vmem>>, %arg7: memref<1x256xf32, #tpu.memory_space<vmem>>, %arg8: memref<1x256xf32, #tpu.memory_space<vmem>>, %arg9: memref<1x1xf32, #tpu.memory_space<vmem>>, %arg10: memref<8x1xf32, #tpu.memory_space<vmem>>) attributes {dimension_semantics = [#tpu.dimension_semantics<parallel>], iteration_bounds = array<i64: 1>, scalar_prefetch = 0 : i64, scratch_operands = 0 : i64, tpu.core_type = #tpu.core_type<tc>, window_params = [{transform_indices = @transform_0, window_bounds = array<i64: 8, 3>}, {transform_indices = @transform_1, window_bounds = array<i64: 8, 2>}, {pipeline_mode = #tpu.pipeline_mode<synchronous>, transform_indices = @transform_2, window_bounds = array<i64: 3, 256>}, {pipeline_mode = #tpu.pipeline_mode<synchronous>, transform_indices = @transform_3, window_bounds = array<i64: 2, 256>}, {pipeline_mode = #tpu.pipeline_mode<synchronous>, transform_indices = @transform_4, window_bounds = array<i64: 1, 256>}, {pipeline_mode = #tpu.pipeline_mode<synchronous>, transform_indices = @transform_5, window_bounds = array<i64: 256, 256>}, {pipeline_mode = #tpu.pipeline_mode<synchronous>, transform_indices = @transform_6, window_bounds = array<i64: 1, 256>}, {pipeline_mode = #tpu.pipeline_mode<synchronous>, transform_indices = @transform_7, window_bounds = array<i64: 1, 256>}, {pipeline_mode = #tpu.pipeline_mode<synchronous>, transform_indices = @transform_8, window_bounds = array<i64: 1, 1>}, {transform_indices = @transform_9, window_bounds = array<i64: 8, 1>}]} {
    %c0 = arith.constant 0 : index
    %c0_0 = arith.constant 0 : index
    %0 = vector.load %arg1[%c0, %c0_0] : memref<8x3xf32, #tpu.memory_space<vmem>>, vector<8x3xf32>
    %c0_1 = arith.constant 0 : index
    %c0_2 = arith.constant 0 : index
    %1 = vector.load %arg2[%c0_1, %c0_2] : memref<8x2xf32, #tpu.memory_space<vmem>>, vector<8x2xf32>
    %c0_3 = arith.constant 0 : index
    %c0_4 = arith.constant 0 : index
    %2 = vector.load %arg3[%c0_3, %c0_4] : memref<3x256xf32, #tpu.memory_space<vmem>>, vector<3x256xf32>
    %c0_5 = arith.constant 0 : index
    %c0_6 = arith.constant 0 : index
    %3 = vector.load %arg4[%c0_5, %c0_6] : memref<2x256xf32, #tpu.memory_space<vmem>>, vector<2x256xf32>
    %c0_7 = arith.constant 0 : index
    %c0_8 = arith.constant 0 : index
    %4 = vector.load %arg5[%c0_7, %c0_8] : memref<1x256xf32, #tpu.memory_space<vmem>>, vector<1x256xf32>
    %5 = vector.extract_strided_slice %0 {offsets = [0, 0], sizes = [8, 1], strides = [1, 1]} : vector<8x3xf32> to vector<8x1xf32>
    %6 = vector.extract_strided_slice %2 {offsets = [0, 0], sizes = [1, 256], strides = [1, 1]} : vector<3x256xf32> to vector<1x256xf32>
    %7 = vector.broadcast %5 : vector<8x1xf32> to vector<8x256xf32>
    %8 = vector.broadcast %6 : vector<1x256xf32> to vector<8x256xf32>
    %9 = arith.mulf %7, %8 : vector<8x256xf32>
    %10 = vector.broadcast %4 : vector<1x256xf32> to vector<8x256xf32>
    %11 = arith.addf %10, %9 : vector<8x256xf32>
    %12 = vector.extract_strided_slice %0 {offsets = [0, 1], sizes = [8, 1], strides = [1, 1]} : vector<8x3xf32> to vector<8x1xf32>
    %13 = vector.extract_strided_slice %2 {offsets = [1, 0], sizes = [1, 256], strides = [1, 1]} : vector<3x256xf32> to vector<1x256xf32>
    %14 = vector.broadcast %12 : vector<8x1xf32> to vector<8x256xf32>
    %15 = vector.broadcast %13 : vector<1x256xf32> to vector<8x256xf32>
    %16 = arith.mulf %14, %15 : vector<8x256xf32>
    %17 = arith.addf %11, %16 : vector<8x256xf32>
    %18 = vector.extract_strided_slice %0 {offsets = [0, 2], sizes = [8, 1], strides = [1, 1]} : vector<8x3xf32> to vector<8x1xf32>
    %19 = vector.extract_strided_slice %2 {offsets = [2, 0], sizes = [1, 256], strides = [1, 1]} : vector<3x256xf32> to vector<1x256xf32>
    %20 = vector.broadcast %18 : vector<8x1xf32> to vector<8x256xf32>
    %21 = vector.broadcast %19 : vector<1x256xf32> to vector<8x256xf32>
    %22 = arith.mulf %20, %21 : vector<8x256xf32>
    %23 = arith.addf %17, %22 : vector<8x256xf32>
    %24 = vector.extract_strided_slice %1 {offsets = [0, 0], sizes = [8, 1], strides = [1, 1]} : vector<8x2xf32> to vector<8x1xf32>
    %25 = vector.extract_strided_slice %3 {offsets = [0, 0], sizes = [1, 256], strides = [1, 1]} : vector<2x256xf32> to vector<1x256xf32>
    %26 = vector.broadcast %24 : vector<8x1xf32> to vector<8x256xf32>
    %27 = vector.broadcast %25 : vector<1x256xf32> to vector<8x256xf32>
    %28 = arith.mulf %26, %27 : vector<8x256xf32>
    %29 = arith.addf %23, %28 : vector<8x256xf32>
    %30 = vector.extract_strided_slice %1 {offsets = [0, 1], sizes = [8, 1], strides = [1, 1]} : vector<8x2xf32> to vector<8x1xf32>
    %31 = vector.extract_strided_slice %3 {offsets = [1, 0], sizes = [1, 256], strides = [1, 1]} : vector<2x256xf32> to vector<1x256xf32>
    %32 = vector.broadcast %30 : vector<8x1xf32> to vector<8x256xf32>
    %33 = vector.broadcast %31 : vector<1x256xf32> to vector<8x256xf32>
    %34 = arith.mulf %32, %33 : vector<8x256xf32>
    %35 = arith.addf %29, %34 : vector<8x256xf32>
    %cst = arith.constant 0.000000e+00 : f32
    %36 = vector.broadcast %cst : f32 to vector<8x256xf32>
    %37 = arith.maximumf %35, %36 : vector<8x256xf32>
    %c0_9 = arith.constant 0 : index
    %c0_10 = arith.constant 0 : index
    %38 = vector.load %arg6[%c0_9, %c0_10] : memref<256x256xf32, #tpu.memory_space<vmem>>, vector<256x256xf32>
    %cst_11 = arith.constant dense<0.000000e+00> : vector<8x256xf32>
    %39 = tpu.matmul %37, %38, %cst_11 {dimension_numbers = #tpu.dot_dimension_numbers<[1], [0], [0], [1], [0, 0, 1, 1], [], []>} : vector<8x256xf32>, vector<256x256xf32>, vector<8x256xf32> -> vector<8x256xf32>
    %c0_12 = arith.constant 0 : index
    %c0_13 = arith.constant 0 : index
    %40 = vector.load %arg7[%c0_12, %c0_13] : memref<1x256xf32, #tpu.memory_space<vmem>>, vector<1x256xf32>
    %41 = vector.broadcast %40 : vector<1x256xf32> to vector<8x256xf32>
    %42 = arith.addf %39, %41 : vector<8x256xf32>
    %cst_14 = arith.constant 0.000000e+00 : f32
    %43 = vector.broadcast %cst_14 : f32 to vector<8x256xf32>
    %44 = arith.maximumf %42, %43 : vector<8x256xf32>
    %c0_15 = arith.constant 0 : index
    %c0_16 = arith.constant 0 : index
    %45 = vector.load %arg8[%c0_15, %c0_16] : memref<1x256xf32, #tpu.memory_space<vmem>>, vector<1x256xf32>
    %46 = vector.broadcast %45 : vector<1x256xf32> to vector<8x256xf32>
    %47 = arith.mulf %44, %46 : vector<8x256xf32>
    %cst_17 = arith.constant dense<0.000000e+00> : vector<8xf32>
    %48 = vector.multi_reduction <add>, %47, %cst_17 [1] : vector<8x256xf32> to vector<8xf32>
    %49 = vector.shape_cast %48 : vector<8xf32> to vector<8x1xf32>
    %c0_18 = arith.constant 0 : index
    %c0_19 = arith.constant 0 : index
    %50 = vector.load %arg9[%c0_18, %c0_19] : memref<1x1xf32, #tpu.memory_space<vmem>>, vector<1x1xf32>
    %51 = vector.broadcast %50 : vector<1x1xf32> to vector<8x1xf32>
    %52 = arith.addf %49, %51 : vector<8x1xf32>
    %c0_20 = arith.constant 0 : index
    %c0_21 = arith.constant 0 : index
    %53 = vector.load %arg10[%c0_20, %c0_21] : memref<8x1xf32, #tpu.memory_space<vmem>>, vector<8x1xf32>
    tpu.vector_store %arg10[%c0_20, %c0_21], %52 {strides = array<i32>} : memref<8x1xf32, #tpu.memory_space<vmem>>, vector<8x1xf32>,
    return
  }
  func.func @transform_0(%arg0: i32) -> (i32, i32) {
    %c0_i32 = arith.constant 0 : i32
    %c0_i32_0 = arith.constant 0 : i32
    return %arg0, %c0_i32 : i32, i32
  }
  func.func @transform_1(%arg0: i32) -> (i32, i32) {
    %c0_i32 = arith.constant 0 : i32
    %c0_i32_0 = arith.constant 0 : i32
    return %arg0, %c0_i32 : i32, i32
  }
  func.func @transform_2(%arg0: i32) -> (i32, i32) {
    %c0_i32 = arith.constant 0 : i32
    %c0_i32_0 = arith.constant 0 : i32
    %c0_i32_1 = arith.constant 0 : i32
    return %c0_i32, %c0_i32_0 : i32, i32
  }
  func.func @transform_3(%arg0: i32) -> (i32, i32) {
    %c0_i32 = arith.constant 0 : i32
    %c0_i32_0 = arith.constant 0 : i32
    %c0_i32_1 = arith.constant 0 : i32
    return %c0_i32, %c0_i32_0 : i32, i32
  }
  func.func @transform_4(%arg0: i32) -> (i32, i32) {
    %c0_i32 = arith.constant 0 : i32
    %c0_i32_0 = arith.constant 0 : i32
    %c0_i32_1 = arith.constant 0 : i32
    return %c0_i32, %c0_i32_0 : i32, i32
  }
  func.func @transform_5(%arg0: i32) -> (i32, i32) {
    %c0_i32 = arith.constant 0 : i32
    %c0_i32_0 = arith.constant 0 : i32
    %c0_i32_1 = arith.constant 0 : i32
    return %c0_i32, %c0_i32_0 : i32, i32
  }
  func.func @transform_6(%arg0: i32) -> (i32, i32) {
    %c0_i32 = arith.constant 0 : i32
    %c0_i32_0 = arith.constant 0 : i32
    %c0_i32_1 = arith.constant 0 : i32
    return %c0_i32, %c0_i32_0 : i32, i32
  }
  func.func @transform_7(%arg0: i32) -> (i32, i32) {
    %c0_i32 = arith.constant 0 : i32
    %c0_i32_0 = arith.constant 0 : i32
    %c0_i32_1 = arith.constant 0 : i32
    return %c0_i32, %c0_i32_0 : i32, i32
  }
  func.func @transform_8(%arg0: i32) -> (i32, i32) {
    %c0_i32 = arith.constant 0 : i32
    %c0_i32_0 = arith.constant 0 : i32
    %c0_i32_1 = arith.constant 0 : i32
    return %c0_i32, %c0_i32_0 : i32, i32
  }
  func.func @transform_9(%arg0: i32) -> (i32, i32) {
    %c0_i32 = arith.constant 0 : i32
    %c0_i32_0 = arith.constant 0 : i32
    return %arg0, %c0_i32 : i32, i32
  }
}

</mosaic_0001>

<llo_original>
// kernel: tpu_custom_call.1
$region0: #{tpu_custom_call.1}
  #allocation0 [shape = 'u32[]', space=smem, size = 0x4, offset = 0x4, fixed_abs, tag = 'smem constant byte address 0x4 - core index']
  #allocation1 [shape = 'u32[72,128]{1,0:T(1,128)}', space=vmem, size = 0x9000, scoped, tag = 'internal scratch']
  #allocation2 [shape = 'f32[1,1]{1,0:T(1,128)S(1)}', space=vmem, size = 0x200, scoped, tag = 'scoped memory for tpu_custom_call.1']
  %s0 = inlined_call_operand.vmem [shape: f32[8,3], index: 0, kind: input, shape index: {}]
  %s1 = inlined_call_operand.vmem [shape: f32[8,2], index: 1, kind: input, shape index: {}]
  %s2 = inlined_call_operand.vmem [shape: f32[3,256], index: 2, kind: input, shape index: {}]
  %s3 = inlined_call_operand.vmem [shape: f32[2,256], index: 3, kind: input, shape index: {}]
  %s4 = inlined_call_operand.vmem [shape: f32[1,256], index: 4, kind: input, shape index: {}]
  %s5 = inlined_call_operand.hbm [shape: f32[256,256], index: 5, kind: input, shape index: {}]
  %s6 = inlined_call_operand.vmem [shape: f32[1,256], index: 6, kind: input, shape index: {}]
  %s7 = inlined_call_operand.vmem [shape: f32[1,256], index: 7, kind: input, shape index: {}]
  %s8 = inlined_call_operand.<no memory space> [shape: f32[1,1], index: 8, kind: input, shape index: {}]
  %s9 = inlined_call_operand.vmem [shape: f32[8,1], index: 9, kind: output, shape index: {}]
  %s10 = sld [smem:[#allocation0]]
  $region50: #{tpu_custom_call.1} parent=0
    _
  %s12 = ssub.s32 1, %s10
  %s13 = scalar_select 0, %s12, %s10
  %v14 = vstv %s8
  %15 = vst [vmem:[#allocation2] sm:$0x1] %v14
  $region1: #{tpu_custom_call.1} parent=0
    #allocation3 [shape = 'u8[262144]{0}', space=vmem, size = 0x40000, scoped, tag = 'input window, operand 5, single buffered']
    #allocation4 [shape = 's32[1]{0}', space=sflag, size = 0x4, scoped, tag = 'scoped memory for tpu_custom_call.1']
    %16 = vsyncpa [#allocation4], 0
    // Predicated region
    $region2: #{tpu_custom_call.1} parent=1 // pred_check
      _
    $region3: #{tpu_custom_call.1} parent=1 // pred_check_branch
      %18 = sbr.rel (0) target = $region5
    $region4: #{tpu_custom_call.1} parent=1 // pred_region
      _
    $region5: #{tpu_custom_call.1} parent=1 // pred_fallthru
      _
    // Predicated region
    $region6: #{tpu_custom_call.1} parent=1 // pred_check
      _
    $region7: #{tpu_custom_call.1} parent=1 // pred_check_branch
      %20 = sbr.rel (0) target = $region9
    $region8: #{tpu_custom_call.1} parent=1 // pred_region
      _
    $region9: #{tpu_custom_call.1} parent=1 // pred_fallthru
      _
    // Predicated region
    $region10: #{tpu_custom_call.1} parent=1 // pred_check
      _
    $region11: #{tpu_custom_call.1} parent=1 // pred_check_branch
      %22 = sbr.rel (0) target = $region13
    $region12: #{tpu_custom_call.1} parent=1 // pred_region
      _
    $region13: #{tpu_custom_call.1} parent=1 // pred_fallthru
      _
    // Predicated region
    $region14: #{tpu_custom_call.1} parent=1 // pred_check
      _
    $region15: #{tpu_custom_call.1} parent=1 // pred_check_branch
      %24 = sbr.rel (0) target = $region17
    $region16: #{tpu_custom_call.1} parent=1 // pred_region
      _
    $region17: #{tpu_custom_call.1} parent=1 // pred_fallthru
      _
    // Predicated region
    $region18: #{tpu_custom_call.1} parent=1 // pred_check
      _
    $region19: #{tpu_custom_call.1} parent=1 // pred_check_branch
      %26 = sbr.rel (0) target = $region21
    $region20: #{tpu_custom_call.1} parent=1 // pred_region
      _
    $region21: #{tpu_custom_call.1} parent=1 // pred_fallthru
      _
    // Predicated region
    $region22: #{tpu_custom_call.1} parent=1 // pred_check
      _
    $region23: #{tpu_custom_call.1} parent=1 // pred_check_branch
      %28 = sbr.rel (0) target = $region25
    $region24: #{tpu_custom_call.1} parent=1 // pred_region
      %30 = vsyncadd [#allocation4], 0
      %s31 = sshll.u32 %s5, 4
      %s32 = int_to_ptr.hbm [resolvable:$true] %s31
      %s33 = sshll.u32 [#allocation3], 4
      %s34 = int_to_ptr.vmem [resolvable:$true] %s33
      %39 = dma.hbm_to_vmem [thread:$0]  %s32, 8192, %s34, [#allocation4], 256, 256, 16
    $region25: #{tpu_custom_call.1} parent=1 // pred_fallthru
      _
    // Predicated region
    $region26: #{tpu_custom_call.1} parent=1 // pred_check
      _
    $region27: #{tpu_custom_call.1} parent=1 // pred_check_branch
      %41 = sbr.rel (0) target = $region29
    $region28: #{tpu_custom_call.1} parent=1 // pred_region
      _
    $region29: #{tpu_custom_call.1} parent=1 // pred_fallthru
      _
    // Predicated region
    $region30: #{tpu_custom_call.1} parent=1 // pred_check
      _
    $region31: #{tpu_custom_call.1} parent=1 // pred_check_branch
      %43 = sbr.rel (0) target = $region33
    $region32: #{tpu_custom_call.1} parent=1 // pred_region
      _
    $region33: #{tpu_custom_call.1} parent=1 // pred_fallthru
      _
    // Predicated region
    $region34: #{tpu_custom_call.1} parent=1 // pred_check
      _
    $region35: #{tpu_custom_call.1} parent=1 // pred_check_branch
      %45 = sbr.rel (0) target = $region37
    $region36: #{tpu_custom_call.1} parent=1 // pred_region
      _
    $region37: #{tpu_custom_call.1} parent=1 // pred_fallthru
      _
    // Predicated region
    $region38: #{tpu_custom_call.1} parent=1 // pred_check
      _
    $region39: #{tpu_custom_call.1} parent=1 // pred_check_branch
      %47 = sbr.rel (0) target = $region41
    $region40: #{tpu_custom_call.1} parent=1 // pred_region
      %49 = dma.done [#allocation4], 8192
    $region41: #{tpu_custom_call.1} parent=1 // pred_fallthru
      _
    %v50 = vld [vmem:[%s0] sm:$0xff]
    %v51 = vld [vmem:[%s1] sm:$0xff]
    %v52 = vld [vmem:[%s2] sm:$0x77]
    %v53 = vld [vmem:[%s3] sm:$0xf]
    %v54 = vld [vmem:[%s4] sm:$0x3]
    %56 = vset.pattern.permute.xlu0 0
    %57 = vperm.xlu0 %56, %v50
    %v58 = vpop.permute.xlu0 %57
    %v61 = vperm.slane %v52, 0
    %v62 = vperm.slane %v52, 4
    %v65 = vperm.slane %v61, 0
    %v66 = vperm.slane %v62, 0
    %v67 = vmul.f32 %v58, %v65
    %v68 = vmul.f32 %v58, %v66
    %v70 = vperm.slane %v54, 0
    %v71 = vperm.slane %v54, 1
    %v74 = vadd.f32 %v70, %v67
    %v75 = vadd.f32 %v71, %v68
    %76 = vset.pattern.permute.xlu0 1
    %77 = vperm.xlu0 %76, %v50
    %v78 = vpop.permute.xlu0 %77
    %v80 = vperm.slane %v52, 1
    %v81 = vperm.slane %v52, 5
    %v84 = vperm.slane %v80, 1
    %v85 = vperm.slane %v81, 1
    %v86 = vmul.f32 %v78, %v84
    %v87 = vmul.f32 %v78, %v85
    %v88 = vadd.f32 %v74, %v86
    %v89 = vadd.f32 %v75, %v87
    %90 = vset.pattern.permute.xlu0 2
    %91 = vperm.xlu0 %90, %v50
    %v92 = vpop.permute.xlu0 %91
    %v94 = vperm.slane %v52, 2
    %v95 = vperm.slane %v52, 6
    %v98 = vperm.slane %v94, 2
    %v99 = vperm.slane %v95, 2
    %v100 = vmul.f32 %v92, %v98
    %v101 = vmul.f32 %v92, %v99
    %v102 = vadd.f32 %v88, %v100
    %v103 = vadd.f32 %v89, %v101
    %105 = vset.pattern.permute.xlu0 0
    %106 = vperm.xlu0 %105, %v51
    %v107 = vpop.permute.xlu0 %106
    %v110 = vperm.slane %v53, 0
    %v111 = vperm.slane %v53, 2
    %v114 = vperm.slane %v110, 0
    %v115 = vperm.slane %v111, 0
    %v116 = vmul.f32 %v107, %v114
    %v117 = vmul.f32 %v107, %v115
    %v118 = vadd.f32 %v102, %v116
    %v119 = vadd.f32 %v103, %v117
    %120 = vset.pattern.permute.xlu0 1
    %121 = vperm.xlu0 %120, %v51
    %v122 = vpop.permute.xlu0 %121
    %v124 = vperm.slane %v53, 1
    %v125 = vperm.slane %v53, 3
    %v128 = vperm.slane %v124, 1
    %v129 = vperm.slane %v125, 1
    %v130 = vmul.f32 %v122, %v128
    %v131 = vmul.f32 %v122, %v129
    %v132 = vadd.f32 %v118, %v130
    %v133 = vadd.f32 %v119, %v131
    %v134 = vmax.f32 %v132, 0.0
    %v135 = vmax.f32 %v133, 0.0
    %v136 = vld [vmem:[#allocation3] sm:$0xff]
    %v137 = vld [vmem:[#allocation3 + $0x8] sm:$0xff]
    %v138 = vld [vmem:[#allocation3 + $0x10] sm:$0xff]
    %v139 = vld [vmem:[#allocation3 + $0x18] sm:$0xff]
    %v140 = vld [vmem:[#allocation3 + $0x20] sm:$0xff]
    %v141 = vld [vmem:[#allocation3 + $0x28] sm:$0xff]
    %v142 = vld [vmem:[#allocation3 + $0x30] sm:$0xff]
    %v143 = vld [vmem:[#allocation3 + $0x38] sm:$0xff]
    %v144 = vld [vmem:[#allocation3 + $0x40] sm:$0xff]
    %v145 = vld [vmem:[#allocation3 + $0x48] sm:$0xff]
    %v146 = vld [vmem:[#allocation3 + $0x50] sm:$0xff]
    %v147 = vld [vmem:[#allocation3 + $0x58] sm:$0xff]
    %v148 = vld [vmem:[#allocation3 + $0x60] sm:$0xff]
    %v149 = vld [vmem:[#allocation3 + $0x68] sm:$0xff]
    %v150 = vld [vmem:[#allocation3 + $0x70] sm:$0xff]
    %v151 = vld [vmem:[#allocation3 + $0x78] sm:$0xff]
    %v152 = vld [vmem:[#allocation3 + $0x80] sm:$0xff]
    %v153 = vld [vmem:[#allocation3 + $0x88] sm:$0xff]
    %v154 = vld [vmem:[#allocation3 + $0x90] sm:$0xff]
    %v155 = vld [vmem:[#allocation3 + $0x98] sm:$0xff]
    %v156 = vld [vmem:[#allocation3 + $0xa0] sm:$0xff]
    %v157 = vld [vmem:[#allocation3 + $0xa8] sm:$0xff]
    %v158 = vld [vmem:[#allocation3 + $0xb0] sm:$0xff]
    %v159 = vld [vmem:[#allocation3 + $0xb8] sm:$0xff]
    %v160 = vld [vmem:[#allocation3 + $0xc0] sm:$0xff]
    %v161 = vld [vmem:[#allocation3 + $0xc8] sm:$0xff]
    %v162 = vld [vmem:[#allocation3 + $0xd0] sm:$0xff]
    %v163 = vld [vmem:[#allocation3 + $0xd8] sm:$0xff]
    %v164 = vld [vmem:[#allocation3 + $0xe0] sm:$0xff]
    %v165 = vld [vmem:[#allocation3 + $0xe8] sm:$0xff]
    %v166 = vld [vmem:[#allocation3 + $0xf0] sm:$0xff]
    %v167 = vld [vmem:[#allocation3 + $0xf8] sm:$0xff]
    %v168 = vld [vmem:[#allocation3 + $0x100] sm:$0xff]
    %v169 = vld [vmem:[#allocation3 + $0x108] sm:$0xff]
    %v170 = vld [vmem:[#allocation3 + $0x110] sm:$0xff]
    %v171 = vld [vmem:[#allocation3 + $0x118] sm:$0xff]
    %v172 = vld [vmem:[#allocation3 + $0x120] sm:$0xff]
    %v173 = vld [vmem:[#allocation3 + $0x128] sm:$0xff]
    %v174 = vld [vmem:[#allocation3 + $0x130] sm:$0xff]
    %v175 = vld [vmem:[#allocation3 + $0x138] sm:$0xff]
    %v176 = vld [vmem:[#allocation3 + $0x140] sm:$0xff]
    %v177 = vld [vmem:[#allocation3 + $0x148] sm:$0xff]
    %v178 = vld [vmem:[#allocation3 + $0x150] sm:$0xff]
    %v179 = vld [vmem:[#allocation3 + $0x158] sm:$0xff]
    %v180 = vld [vmem:[#allocation3 + $0x160] sm:$0xff]
    %v181 = vld [vmem:[#allocation3 + $0x168] sm:$0xff]
    %v182 = vld [vmem:[#allocation3 + $0x170] sm:$0xff]
    %v183 = vld [vmem:[#allocation3 + $0x178] sm:$0xff]
    %v184 = vld [vmem:[#allocation3 + $0x180] sm:$0xff]
    %v185 = vld [vmem:[#allocation3 + $0x188] sm:$0xff]
    %v186 = vld [vmem:[#allocation3 + $0x190] sm:$0xff]
    %v187 = vld [vmem:[#allocation3 + $0x198] sm:$0xff]
    %v188 = vld [vmem:[#allocation3 + $0x1a0] sm:$0xff]
    %v189 = vld [vmem:[#allocation3 + $0x1a8] sm:$0xff]
    %v190 = vld [vmem:[#allocation3 + $0x1b0] sm:$0xff]
    %v191 = vld [vmem:[#allocation3 + $0x1b8] sm:$0xff]
    %v192 = vld [vmem:[#allocation3 + $0x1c0] sm:$0xff]
    %v193 = vld [vmem:[#allocation3 + $0x1c8] sm:$0xff]
    %v194 = vld [vmem:[#allocation3 + $0x1d0] sm:$0xff]
    %v195 = vld [vmem:[#allocation3 + $0x1d8] sm:$0xff]
    %v196 = vld [vmem:[#allocation3 + $0x1e0] sm:$0xff]
    %v197 = vld [vmem:[#allocation3 + $0x1e8] sm:$0xff]
    %v198 = vld [vmem:[#allocation3 + $0x1f0] sm:$0xff]
    %v199 = vld [vmem:[#allocation3 + $0x1f8] sm:$0xff]
    %v200 = vld [vmem:[%s6] sm:$0x3]
    %v202 = vperm.slane %v200, 0
    %v203 = vperm.slane %v200, 1
    %206 = vmatpush.msra.mxu0 %v166
    %207 = vmatpush.msra.mxu0 %v164
    %208 = vmatpush.msra.mxu0 %v162
    %209 = vmatpush.msra.mxu0 %v160
    %210 = vmatpush.msra.mxu0 %v158
    %211 = vmatpush.msra.mxu0 %v156
    %212 = vmatpush.msra.mxu0 %v154
    %213 = vmatpush.msra.mxu0 %v152
    %214 = vmatpush.msra.mxu0 %v150
    %215 = vmatpush.msra.mxu0 %v148
    %216 = vmatpush.msra.mxu0 %v146
    %217 = vmatpush.msra.mxu0 %v144
    %218 = vmatpush.msra.mxu0 %v142
    %219 = vmatpush.msra.mxu0 %v140
    %220 = vmatpush.msra.mxu0 %v138
    %221 = vmatpush.msra.mxu0 %v136
    %222 = vmatmul.f32.gmra.mxu0 %v134
    %v223 = vpop.f32.mrf.mxu0
    %v224 = vadd.f32 %v202, %v223
    %225 = vdwg.mxu0
    %226 = vmatpush.msra.mxu0 %v198
    %227 = vmatpush.msra.mxu0 %v196
    %228 = vmatpush.msra.mxu0 %v194
    %229 = vmatpush.msra.mxu0 %v192
    %230 = vmatpush.msra.mxu0 %v190
    %231 = vmatpush.msra.mxu0 %v188
    %232 = vmatpush.msra.mxu0 %v186
    %233 = vmatpush.msra.mxu0 %v184
    %234 = vmatpush.msra.mxu0 %v182
    %235 = vmatpush.msra.mxu0 %v180
    %236 = vmatpush.msra.mxu0 %v178
    %237 = vmatpush.msra.mxu0 %v176
    %238 = vmatpush.msra.mxu0 %v174
    %239 = vmatpush.msra.mxu0 %v172
    %240 = vmatpush.msra.mxu0 %v170
    %241 = vmatpush.msra.mxu0 %v168
    %242 = vmatmul.f32.gmra.mxu0 %v135
    %v243 = vpop.f32.mrf.mxu0
    %v244 = vadd.f32 %v224, %v243
    %245 = vdwg.mxu0
    %246 = vmatpush.msra.mxu0 %v167
    %247 = vmatpush.msra.mxu0 %v165
    %248 = vmatpush.msra.mxu0 %v163
    %249 = vmatpush.msra.mxu0 %v161
    %250 = vmatpush.msra.mxu0 %v159
    %251 = vmatpush.msra.mxu0 %v157
    %252 = vmatpush.msra.mxu0 %v155
    %253 = vmatpush.msra.mxu0 %v153
    %254 = vmatpush.msra.mxu0 %v151
    %255 = vmatpush.msra.mxu0 %v149
    %256 = vmatpush.msra.mxu0 %v147
    %257 = vmatpush.msra.mxu0 %v145
    %258 = vmatpush.msra.mxu0 %v143
    %259 = vmatpush.msra.mxu0 %v141
    %260 = vmatpush.msra.mxu0 %v139
    %261 = vmatpush.msra.mxu0 %v137
    %262 = vmatmul.f32.gmra.mxu0 %v134
    %v263 = vpop.f32.mrf.mxu0
    %v264 = vadd.f32 %v203, %v263
    %265 = vdwg.mxu0
    %266 = vmatpush.msra.mxu0 %v199
    %267 = vmatpush.msra.mxu0 %v197
    %268 = vmatpush.msra.mxu0 %v195
    %269 = vmatpush.msra.mxu0 %v193
    %270 = vmatpush.msra.mxu0 %v191
    %271 = vmatpush.msra.mxu0 %v189
    %272 = vmatpush.msra.mxu0 %v187
    %273 = vmatpush.msra.mxu0 %v185
    %274 = vmatpush.msra.mxu0 %v183
    %275 = vmatpush.msra.mxu0 %v181
    %276 = vmatpush.msra.mxu0 %v179
    %277 = vmatpush.msra.mxu0 %v177
    %278 = vmatpush.msra.mxu0 %v175
    %279 = vmatpush.msra.mxu0 %v173
    %280 = vmatpush.msra.mxu0 %v171
    %281 = vmatpush.msra.mxu0 %v169
    %282 = vmatmul.f32.gmra.mxu0 %v135
    %v283 = vpop.f32.mrf.mxu0
    %v284 = vadd.f32 %v264, %v283
    %285 = vdwg.mxu0
    %v286 = vmax.f32 %v244, 0.0
    %v287 = vmax.f32 %v284, 0.0
    %v288 = vld [vmem:[%s7] sm:$0x3]
    %v290 = vperm.slane %v288, 0
    %v291 = vperm.slane %v288, 1
    %v294 = vmul.f32 %v286, %v290
    %v295 = vmul.f32 %v287, %v291
    %v296 = vadd.f32 %v294, %v295
    %297 = vadd.xlane.f32.xlu0 %v296
    %v298 = vpop.xlane.xlu0 %297
    %v299 = vld [vmem:[#allocation2] sm:$0x1]
    %v301 = vperm.slane %v299, 0
    %v303 = vadd.f32 %v298, %v301
    %vm304 = vcmask 7168
    %305 = vst.msk [vmem:[%s9] sm:$0xff] %vm304, %v303
    // Predicated region
    $region42: #{tpu_custom_call.1} parent=1 // pred_check
      _
    $region43: #{tpu_custom_call.1} parent=1 // pred_check_branch
      %307 = sbr.rel (0) target = $region45
    $region44: #{tpu_custom_call.1} parent=1 // pred_region
      _
    $region45: #{tpu_custom_call.1} parent=1 // pred_fallthru
      _
    // Predicated region
    $region46: #{tpu_custom_call.1} parent=1 // pred_check
      _
    $region47: #{tpu_custom_call.1} parent=1 // pred_check_branch
      %309 = sbr.rel (0) target = $region49
    $region48: #{tpu_custom_call.1} parent=1 // pred_region
      _
    $region49: #{tpu_custom_call.1} parent=1 // pred_fallthru
      _
    %310 = vsyncpa [#allocation4], 1

</llo_original>
